<compile_context>
chip_gen: v7x
topology: tpu7x:2x2x1
jax: 0.10.0
libtpu: 0.0.40
codegen_flags: <defaults>
</compile_context>

<pallas_src>
import functools

import jax
import jax.numpy as jnp
from jax.experimental import pallas as pl
from jax.experimental.pallas import tpu as pltpu


def _round_up(x: int, m: int) -> int:
    return ((x + m - 1) // m) * m


_VMEM_BUDGET_BYTES = 24 * 1024 * 1024   # conservative: fits v7x (64 MiB phys) with headroom
_VMEM_LIMIT_BYTES = 48 * 1024 * 1024


def _pick_tile_m_discrete(M: int, k_pad: int, d_out_pad: int, tile_m: int) -> int:
    # Per-row VMEM bytes (f32): one-hot + iota/compare temps (~3*k_pad), lane-padded obs block
    # (2 buffers), padded out block (2 buffers).
    per_row = (3 * k_pad + 2 * 128 + 2 * d_out_pad) * 4
    fused_bytes = (k_pad * d_out_pad + 128 * d_out_pad) * 4     # single-buffered table + bias
    avail = max(_VMEM_BUDGET_BYTES - fused_bytes, 1 << 20)
    tm_cap = max(8, (avail // per_row) // 8 * 8)
    tm = min(tile_m, tm_cap, _round_up(M, 8))
    if M >= 4096:
        # Keep >= 4 grid blocks so v7x's two TensorCores have work to shard; per-step overhead
        # is negligible at this M. Small M keeps a single block (no wasted step cost).
        tm = min(tm, max(8, _round_up(pl.cdiv(M, 4), 8)))
    return tm


def _pick_tile_m_linear(M: int, d_in_pad: int, d_out_pad: int, tile_m: int) -> int:
    per_row = (2 * d_in_pad + 2 * d_out_pad) * 4
    tm_cap = max(8, (_VMEM_BUDGET_BYTES // per_row) // 8 * 8)
    tm = min(tile_m, tm_cap, _round_up(M, 8))
    if M >= 4096:
        tm = min(tm, max(8, _round_up(pl.cdiv(M, 4), 8)))
    return tm


# ----------------------------------------------------------------------------
# Discrete representation kernel (fused Embedding + Linear):
#   out[m, :] = bias + one_hot_block(obs[m, :]) @ T
# where one_hot_block[m, d*V + obs[m, d]] = 1 and T is the pre-fused table.
# ----------------------------------------------------------------------------
def _discrete_fused_kernel(obs_ref, t_ref, b_ref, out_ref, *, obs_dim, vocab):
    tokens = obs_ref[...]                           # (tm, obs_dim) int32
    tm = tokens.shape[0]
    kp = t_ref.shape[0]                             # obs_dim*vocab padded to 128*n

    # Hoisted segment shift: tokens of dim d index lanes [d*vocab, (d+1)*vocab).
    seg = jax.lax.broadcasted_iota(jnp.int32, (tm, obs_dim), 1) * vocab
    shifted = tokens + seg                          # (tm, obs_dim)

    lane = jax.lax.broadcasted_iota(jnp.int32, (tm, kp), 1)
    # Accumulate boolean masks (disjoint lanes -> OR is exact); single f32 cast at the end.
    mask = lane == shifted[:, 0:1]
    for d in range(1, obs_dim):
        mask = jnp.logical_or(mask, lane == shifted[:, d : d + 1])
    onehot = mask.astype(jnp.float32)

    acc = jnp.dot(onehot, t_ref[...], preferred_element_type=jnp.float32)
    out_ref[...] = (acc + b_ref[...]).astype(out_ref.dtype)


def discrete_embedding_representation(obs, emb_table, w, b, *, tile_m=4096):
    """obs: (B, S, obs_dim) int32 tokens. Returns (B, S, D_out) float32.

    emb_table: (V, ep) embedding weight.
    w:         (ep*obs_dim, D_out) linear weight (stored transposed: x @ w).
    b:         (D_out,) linear bias.
    """
    B, S, obs_dim = obs.shape
    vocab, ep = emb_table.shape
    d_in, d_out = w.shape
    assert d_in == obs_dim * ep

    # ---- fold Embedding + Linear into one (obs_dim*V, D_out) table (tiny, done once) ----
    # Flatten(start_dim=-2) concatenates the obs_dim embeddings, so dim d hits rows
    # [d*ep : (d+1)*ep] of W:  sum_d E[tok_d] @ W_d  ==  onehot_block @ T.
    w3 = w.reshape(obs_dim, ep, d_out)
    fused_t = jnp.einsum("ve,deo->dvo", emb_table, w3).reshape(obs_dim * vocab, d_out)

    k_pad = _round_up(obs_dim * vocab, 128)
    d_out_pad = _round_up(d_out, 128)               # lane-dense output -> unmasked stores
    fused_t = jnp.pad(
        fused_t, ((0, k_pad - obs_dim * vocab), (0, d_out_pad - d_out))
    ).astype(jnp.float32)
    b2d = jnp.pad(b.reshape(1, d_out), ((0, 0), (0, d_out_pad - d_out))).astype(jnp.float32)

    # ---- row tiling with zero padding for the tail ----
    M = B * S
    tm = _pick_tile_m_discrete(M, k_pad, d_out_pad, tile_m)
    m_pad = _round_up(M, tm)
    obs2d = jnp.clip(obs.reshape(M, obs_dim).astype(jnp.int32), 0, vocab - 1)
    if m_pad != M:
        obs2d = jnp.pad(obs2d, ((0, m_pad - M), (0, 0)))      # token 0 is a valid id

    kernel = functools.partial(_discrete_fused_kernel, obs_dim=obs_dim, vocab=vocab)
    out2d = pl.pallas_call(
        kernel,
        out_shape=jax.ShapeDtypeStruct((m_pad, d_out_pad), jnp.float32),
        grid_spec=pltpu.PrefetchScalarGridSpec(
            num_scalar_prefetch=0,
            grid=(pl.cdiv(m_pad, tm),),
            in_specs=[
                pl.BlockSpec((tm, obs_dim), lambda i: (i, 0)),
                # Constant operands: single-buffered (fetched once, never changes).
                pl.BlockSpec((k_pad, d_out_pad), lambda i: (0, 0),
                             pipeline_mode=pl.Buffered(1)),
                pl.BlockSpec((1, d_out_pad), lambda i: (0, 0),
                             pipeline_mode=pl.Buffered(1)),
            ],
            out_specs=pl.BlockSpec((tm, d_out_pad), lambda i: (i, 0)),
        ),
        compiler_params=pltpu.CompilerParams(
            dimension_semantics=("parallel",),
            vmem_limit_bytes=_VMEM_LIMIT_BYTES,
        ),
    )(obs2d, fused_t, b2d)
    return out2d[:M, :d_out].reshape(B, S, d_out)


# ----------------------------------------------------------------------------
# Continuous representation kernel: plain Linear(obs_dim, D_out).
# ----------------------------------------------------------------------------
def _linear_kernel(x_ref, w_ref, b_ref, out_ref):
    acc = jnp.dot(x_ref[...], w_ref[...], preferred_element_type=jnp.float32)
    out_ref[...] = (acc + b_ref[...]).astype(out_ref.dtype)


def continuous_embedding_representation(x, w, b, *, tile_m=4096):
    """x: (B, S, obs_dim) float32. Returns (B, S, D_out) float32."""
    B, S, obs_dim = x.shape
    d_in, d_out = w.shape
    assert d_in == obs_dim

    d_out_pad = _round_up(d_out, 128)               # lane-dense output -> unmasked stores
    w_pad = jnp.pad(w, ((0, 0), (0, d_out_pad - d_out))).astype(jnp.float32)
    b2d = jnp.pad(b.reshape(1, d_out), ((0, 0), (0, d_out_pad - d_out))).astype(jnp.float32)

    M = B * S
    tm = _pick_tile_m_linear(M, max(128, _round_up(d_in, 128)), d_out_pad, tile_m)
    m_pad = _round_up(M, tm)
    x2d = x.reshape(M, obs_dim).astype(jnp.float32)
    if m_pad != M:
        x2d = jnp.pad(x2d, ((0, m_pad - M), (0, 0)))

    # TODO(synk): at tiny M (single grid block) this layer is pure launch overhead; consider
    # letting XLA fuse the matmul into the consumer instead of a standalone pallas_call.
    out2d = pl.pallas_call(
        _linear_kernel,
        out_shape=jax.ShapeDtypeStruct((m_pad, d_out_pad), jnp.float32),
        grid_spec=pltpu.PrefetchScalarGridSpec(
            num_scalar_prefetch=0,
            grid=(pl.cdiv(m_pad, tm),),
            in_specs=[
                pl.BlockSpec((tm, d_in), lambda i: (i, 0)),
                pl.BlockSpec((d_in, d_out_pad), lambda i: (0, 0),
                             pipeline_mode=pl.Buffered(1)),
                pl.BlockSpec((1, d_out_pad), lambda i: (0, 0),
                             pipeline_mode=pl.Buffered(1)),
            ],
            out_specs=pl.BlockSpec((tm, d_out_pad), lambda i: (i, 0)),
        ),
        compiler_params=pltpu.CompilerParams(
            dimension_semantics=("parallel",),
            vmem_limit_bytes=_VMEM_LIMIT_BYTES,
        ),
    )(x2d, w_pad, b2d)
    return out2d[:M, :d_out].reshape(B, S, d_out)


if __name__ == "__main__":
    key = jax.random.PRNGKey(0)

    # ---- discrete representation (make_discrete_representation) ----
    B, S = 2, 8
    vocab_sizes = 10
    obs_dim = 8
    embed_per_obs_dim = 8
    outer_embed_size = 32

    k1, k2, k3, k4, k5, k6, k7, k8 = jax.random.split(key, 8)
    # nn.Embedding weight ~ N(0, 1)
    emb_table = jax.random.normal(k1, (vocab_sizes, embed_per_obs_dim), jnp.float32)
    # nn.Linear(embed_per_obs_dim*obs_dim, outer): uniform(-1/sqrt(fan_in), 1/sqrt(fan_in))
    fan_in = embed_per_obs_dim * obs_dim
    bound = 1.0 / jnp.sqrt(fan_in)
    # Stored as (in, out) so the kernel does x @ W directly (equals x @ W_torch.T).
    w_disc = jax.random.uniform(k2, (fan_in, outer_embed_size), jnp.float32, -bound, bound)
    b_disc = jax.random.uniform(k3, (outer_embed_size,), jnp.float32, -bound, bound)

    obs_tokens = jax.random.randint(k4, (B, S, obs_dim), 0, vocab_sizes, jnp.int32)

    out_disc = discrete_embedding_representation(obs_tokens, emb_table, w_disc, b_disc)
    out_disc = jax.block_until_ready(out_disc)

    # Pure-JAX reference (Embedding -> Flatten(-2) -> Linear)
    ref_disc = jnp.take(emb_table, obs_tokens, axis=0).reshape(B, S, fan_in) @ w_disc + b_disc
    assert out_disc.shape == (B, S, outer_embed_size)
    assert jnp.allclose(out_disc, ref_disc, atol=1e-4, rtol=1e-4)

    # Tail-handling check: M = B*S not a multiple of the row tile.
    B2, S2 = 3, 5
    obs_tail = jax.random.randint(k8, (B2, S2, obs_dim), 0, vocab_sizes, jnp.int32)
    out_tail = jax.block_until_ready(
        discrete_embedding_representation(obs_tail, emb_table, w_disc, b_disc)
    )
    ref_tail = jnp.take(emb_table, obs_tail, axis=0).reshape(B2, S2, fan_in) @ w_disc + b_disc
    assert out_tail.shape == (B2, S2, outer_embed_size)
    assert jnp.allclose(out_tail, ref_tail, atol=1e-4, rtol=1e-4)

    # Multi-block grid check (forces grid > 1 with a small tile).
    out_grid = jax.block_until_ready(
        discrete_embedding_representation(obs_tokens, emb_table, w_disc, b_disc, tile_m=8)
    )
    assert jnp.allclose(out_grid, ref_disc, atol=1e-4, rtol=1e-4)

    # ---- continuous representation (make_continuous_representation) ----
    cont_obs_dim = 8
    bound_c = 1.0 / jnp.sqrt(cont_obs_dim)
    w_cont = jax.random.uniform(k5, (cont_obs_dim, outer_embed_size), jnp.float32, -bound_c, bound_c)
    b_cont = jax.random.uniform(k6, (outer_embed_size,), jnp.float32, -bound_c, bound_c)
    x_cont = jax.random.normal(k7, (B, S, cont_obs_dim), jnp.float32)

    out_cont = continuous_embedding_representation(x_cont, w_cont, b_cont)
    out_cont = jax.block_until_ready(out_cont)
    ref_cont = x_cont @ w_cont + b_cont
    assert out_cont.shape == (B, S, outer_embed_size)
    assert jnp.allclose(out_cont, ref_cont, atol=1e-4, rtol=1e-4)

    print("KERNEL_OK")
</pallas_src>

<mosaic_0001>
module attributes {stable_mosaic.version = 11 : i64} {
  func.func @_discrete_fused_kernel(%arg0: i32, %arg1: memref<16x8xi32, #tpu.memory_space<vmem>>, %arg2: memref<128x128xf32, #tpu.memory_space<vmem>>, %arg3: memref<1x128xf32, #tpu.memory_space<vmem>>, %arg4: memref<16x128xf32, #tpu.memory_space<vmem>>) attributes {dimension_semantics = [#tpu.dimension_semantics<parallel>], iteration_bounds = array<i64: 1>, scalar_prefetch = 0 : i64, scratch_operands = 0 : i64, tpu.core_type = #tpu.core_type<tc>, window_params = [{transform_indices = @transform_0, window_bounds = array<i64: 16, 8>}, {pipeline_mode = #tpu.pipeline_mode<synchronous>, transform_indices = @transform_1, window_bounds = array<i64: 128, 128>}, {pipeline_mode = #tpu.pipeline_mode<synchronous>, transform_indices = @transform_2, window_bounds = array<i64: 1, 128>}, {transform_indices = @transform_3, window_bounds = array<i64: 16, 128>}]} {
    %c0 = arith.constant 0 : index
    %c0_0 = arith.constant 0 : index
    %0 = vector.load %arg1[%c0, %c0_0] : memref<16x8xi32, #tpu.memory_space<vmem>>, vector<16x8xi32>
    %1 = tpu.iota {dimensions = array<i32: 1>} : vector<16x8xi32>
    %c10_i32 = arith.constant 10 : i32
    %2 = vector.broadcast %c10_i32 : i32 to vector<16x8xi32>
    %3 = arith.muli %1, %2 : vector<16x8xi32>
    %4 = arith.addi %0, %3 : vector<16x8xi32>
    %5 = tpu.iota {dimensions = array<i32: 1>} : vector<16x128xi32>
    %6 = vector.extract_strided_slice %4 {offsets = [0, 0], sizes = [16, 1], strides = [1, 1]} : vector<16x8xi32> to vector<16x1xi32>
    %7 = vector.broadcast %6 : vector<16x1xi32> to vector<16x128xi32>
    %8 = arith.cmpi eq, %5, %7 : vector<16x128xi32>
    %9 = vector.extract_strided_slice %4 {offsets = [0, 1], sizes = [16, 1], strides = [1, 1]} : vector<16x8xi32> to vector<16x1xi32>
    %10 = vector.broadcast %9 : vector<16x1xi32> to vector<16x128xi32>
    %11 = arith.cmpi eq, %5, %10 : vector<16x128xi32>
    %12 = arith.ori %8, %11 : vector<16x128xi1>
    %13 = vector.extract_strided_slice %4 {offsets = [0, 2], sizes = [16, 1], strides = [1, 1]} : vector<16x8xi32> to vector<16x1xi32>
    %14 = vector.broadcast %13 : vector<16x1xi32> to vector<16x128xi32>
    %15 = arith.cmpi eq, %5, %14 : vector<16x128xi32>
    %16 = arith.ori %12, %15 : vector<16x128xi1>
    %17 = vector.extract_strided_slice %4 {offsets = [0, 3], sizes = [16, 1], strides = [1, 1]} : vector<16x8xi32> to vector<16x1xi32>
    %18 = vector.broadcast %17 : vector<16x1xi32> to vector<16x128xi32>
    %19 = arith.cmpi eq, %5, %18 : vector<16x128xi32>
    %20 = arith.ori %16, %19 : vector<16x128xi1>
    %21 = vector.extract_strided_slice %4 {offsets = [0, 4], sizes = [16, 1], strides = [1, 1]} : vector<16x8xi32> to vector<16x1xi32>
    %22 = vector.broadcast %21 : vector<16x1xi32> to vector<16x128xi32>
    %23 = arith.cmpi eq, %5, %22 : vector<16x128xi32>
    %24 = arith.ori %20, %23 : vector<16x128xi1>
    %25 = vector.extract_strided_slice %4 {offsets = [0, 5], sizes = [16, 1], strides = [1, 1]} : vector<16x8xi32> to vector<16x1xi32>
    %26 = vector.broadcast %25 : vector<16x1xi32> to vector<16x128xi32>
    %27 = arith.cmpi eq, %5, %26 : vector<16x128xi32>
    %28 = arith.ori %24, %27 : vector<16x128xi1>
    %29 = vector.extract_strided_slice %4 {offsets = [0, 6], sizes = [16, 1], strides = [1, 1]} : vector<16x8xi32> to vector<16x1xi32>
    %30 = vector.broadcast %29 : vector<16x1xi32> to vector<16x128xi32>
    %31 = arith.cmpi eq, %5, %30 : vector<16x128xi32>
    %32 = arith.ori %28, %31 : vector<16x128xi1>
    %33 = vector.extract_strided_slice %4 {offsets = [0, 7], sizes = [16, 1], strides = [1, 1]} : vector<16x8xi32> to vector<16x1xi32>
    %34 = vector.broadcast %33 : vector<16x1xi32> to vector<16x128xi32>
    %35 = arith.cmpi eq, %5, %34 : vector<16x128xi32>
    %36 = arith.ori %32, %35 : vector<16x128xi1>
    %37 = arith.extui %36 : vector<16x128xi1> to vector<16x128xi32>
    %38 = arith.sitofp %37 : vector<16x128xi32> to vector<16x128xf32>
    %c0_1 = arith.constant 0 : index
    %c0_2 = arith.constant 0 : index
    %39 = vector.load %arg2[%c0_1, %c0_2] : memref<128x128xf32, #tpu.memory_space<vmem>>, vector<128x128xf32>
    %cst = arith.constant dense<0.000000e+00> : vector<16x128xf32>
    %40 = tpu.matmul %38, %39, %cst {dimension_numbers = #tpu.dot_dimension_numbers<[1], [0], [0], [1], [0, 0, 1, 1], [], []>} : vector<16x128xf32>, vector<128x128xf32>, vector<16x128xf32> -> vector<16x128xf32>
    %c0_3 = arith.constant 0 : index
    %c0_4 = arith.constant 0 : index
    %41 = vector.load %arg3[%c0_3, %c0_4] : memref<1x128xf32, #tpu.memory_space<vmem>>, vector<1x128xf32>
    %42 = vector.broadcast %41 : vector<1x128xf32> to vector<16x128xf32>
    %43 = arith.addf %40, %42 : vector<16x128xf32>
    %c0_5 = arith.constant 0 : index
    %c0_6 = arith.constant 0 : index
    %44 = vector.load %arg4[%c0_5, %c0_6] : memref<16x128xf32, #tpu.memory_space<vmem>>, vector<16x128xf32>
    tpu.vector_store %arg4[%c0_5, %c0_6], %43 {strides = array<i32>} : memref<16x128xf32, #tpu.memory_space<vmem>>, vector<16x128xf32>,
    return
  }
  func.func @transform_0(%arg0: i32) -> (i32, i32) {
    %c0_i32 = arith.constant 0 : i32
    %c0_i32_0 = arith.constant 0 : i32
    return %arg0, %c0_i32 : i32, i32
  }
  func.func @transform_1(%arg0: i32) -> (i32, i32) {
    %c0_i32 = arith.constant 0 : i32
    %c0_i32_0 = arith.constant 0 : i32
    %c0_i32_1 = arith.constant 0 : i32
    return %c0_i32, %c0_i32_0 : i32, i32
  }
  func.func @transform_2(%arg0: i32) -> (i32, i32) {
    %c0_i32 = arith.constant 0 : i32
    %c0_i32_0 = arith.constant 0 : i32
    %c0_i32_1 = arith.constant 0 : i32
    return %c0_i32, %c0_i32_0 : i32, i32
  }
  func.func @transform_3(%arg0: i32) -> (i32, i32) {
    %c0_i32 = arith.constant 0 : i32
    %c0_i32_0 = arith.constant 0 : i32
    return %arg0, %c0_i32 : i32, i32
  }
}

</mosaic_0001>

<llo_original>
// kernel: tpu_custom_call.1
$region0: #{tpu_custom_call.1}
  #allocation0 [shape = 'u32[]', space=smem, size = 0x4, offset = 0x4, fixed_abs, tag = 'smem constant byte address 0x4 - core index']
  #allocation1 [shape = 'u32[144,128]{1,0:T(1,128)}', space=vmem, size = 0x12000, scoped, tag = 'internal scratch']
  %s0 = inlined_call_operand.vmem [shape: s32[16,8], index: 0, kind: input, shape index: {}]
  %s1 = inlined_call_operand.hbm [shape: f32[128,128], index: 1, kind: input, shape index: {}]
  %s2 = inlined_call_operand.vmem [shape: f32[1,128], index: 2, kind: input, shape index: {}]
  %s3 = inlined_call_operand.hbm [shape: f32[16,128], index: 3, kind: output, shape index: {}]
  %s4 = sld [smem:[#allocation0]]
  $region26: #{tpu_custom_call.1} parent=0
    _
  %s6 = ssub.s32 1, %s4
  %s7 = scalar_select 0, %s6, %s4
  $region1: #{tpu_custom_call.1} parent=0
    #allocation2 [shape = 'u8[65536]{0}', space=vmem, size = 0x10000, scoped, tag = 'input window, operand 1, single buffered']
    #allocation3 [shape = 's32[1]{0}', space=sflag, size = 0x4, scoped, tag = 'scoped memory for tpu_custom_call.1']
    #allocation4 [shape = 's32[1]{0}', space=sflag, size = 0x4, scoped, tag = 'scoped memory for tpu_custom_call.1']
    #allocation5 [shape = 'u8[8192]{0}', space=vmem, size = 0x2000, scoped, tag = 'output window, operand 0, single buffered']
    %8 = vsyncpa [#allocation3], 0
    %9 = vsyncpa [#allocation4], 0
    // Predicated region
    $region2: #{tpu_custom_call.1} parent=1 // pred_check
      _
    $region3: #{tpu_custom_call.1} parent=1 // pred_check_branch
      %11 = sbr.rel (0) target = $region5
    $region4: #{tpu_custom_call.1} parent=1 // pred_region
      _
    $region5: #{tpu_custom_call.1} parent=1 // pred_fallthru
      _
    // Predicated region
    $region6: #{tpu_custom_call.1} parent=1 // pred_check
      _
    $region7: #{tpu_custom_call.1} parent=1 // pred_check_branch
      %13 = sbr.rel (0) target = $region9
    $region8: #{tpu_custom_call.1} parent=1 // pred_region
      %s15 = ssub.s32 2048, 2048
      %16 = vsyncadd [#allocation3], %s15
      %s17 = sshll.u32 [#allocation2], 4
      %s18 = int_to_ptr.vmem [resolvable:$true] %s17
      %23 = dma.hbm_to_vmem [thread:$0]  %s1, 2048, %s18, [#allocation3], 128, 128, 8
    $region9: #{tpu_custom_call.1} parent=1 // pred_fallthru
      _
    // Predicated region
    $region10: #{tpu_custom_call.1} parent=1 // pred_check
      _
    $region11: #{tpu_custom_call.1} parent=1 // pred_check_branch
      %25 = sbr.rel (0) target = $region13
    $region12: #{tpu_custom_call.1} parent=1 // pred_region
      _
    $region13: #{tpu_custom_call.1} parent=1 // pred_fallthru
      _
    // Predicated region
    $region14: #{tpu_custom_call.1} parent=1 // pred_check
      _
    $region15: #{tpu_custom_call.1} parent=1 // pred_check_branch
      %27 = sbr.rel (0) target = $region17
    $region16: #{tpu_custom_call.1} parent=1 // pred_region
      %28 = dma.done [#allocation3], 2048
    $region17: #{tpu_custom_call.1} parent=1 // pred_fallthru
      _
    %v29 = vld [vmem:[%s0] sm:$0xff]
    %v30 = vld [vmem:[%s0 + $0x8] sm:$0xff]
    %v31 = vlaneseq
    %v32 = vand.u32 %v31, 127
    %v33 = vmul.u32 %v32, 10
    %v34 = vadd.s32 %v29, %v33
    %v35 = vadd.s32 %v30, %v33
    %36 = vset.pattern.permute.xlu0 0
    %37 = vperm.xlu0 %36, %v34
    %v38 = vpop.permute.xlu0 %37
    %39 = vset.pattern.permute.xlu0 0
    %40 = vperm.xlu0 %39, %v35
    %v41 = vpop.permute.xlu0 %40
    %vm42 = vcmp.eq.s32.totalorder %v32, %v38
    %vm43 = vcmp.eq.s32.totalorder %v32, %v41
    %44 = vset.pattern.permute.xlu0 1
    %45 = vperm.xlu0 %44, %v34
    %v46 = vpop.permute.xlu0 %45
    %47 = vset.pattern.permute.xlu0 1
    %48 = vperm.xlu0 %47, %v35
    %v49 = vpop.permute.xlu0 %48
    %vm50 = vcmp.eq.s32.totalorder %v32, %v46
    %vm51 = vcmp.eq.s32.totalorder %v32, %v49
    %vm52 = vmor %vm42, %vm50
    %vm53 = vmor %vm43, %vm51
    %54 = vset.pattern.permute.xlu0 2
    %55 = vperm.xlu0 %54, %v34
    %v56 = vpop.permute.xlu0 %55
    %57 = vset.pattern.permute.xlu0 2
    %58 = vperm.xlu0 %57, %v35
    %v59 = vpop.permute.xlu0 %58
    %vm60 = vcmp.eq.s32.totalorder %v32, %v56
    %vm61 = vcmp.eq.s32.totalorder %v32, %v59
    %vm62 = vmor %vm52, %vm60
    %vm63 = vmor %vm53, %vm61
    %64 = vset.pattern.permute.xlu0 3
    %65 = vperm.xlu0 %64, %v34
    %v66 = vpop.permute.xlu0 %65
    %67 = vset.pattern.permute.xlu0 3
    %68 = vperm.xlu0 %67, %v35
    %v69 = vpop.permute.xlu0 %68
    %vm70 = vcmp.eq.s32.totalorder %v32, %v66
    %vm71 = vcmp.eq.s32.totalorder %v32, %v69
    %vm72 = vmor %vm62, %vm70
    %vm73 = vmor %vm63, %vm71
    %74 = vset.pattern.permute.xlu0 4
    %75 = vperm.xlu0 %74, %v34
    %v76 = vpop.permute.xlu0 %75
    %77 = vset.pattern.permute.xlu0 4
    %78 = vperm.xlu0 %77, %v35
    %v79 = vpop.permute.xlu0 %78
    %vm80 = vcmp.eq.s32.totalorder %v32, %v76
    %vm81 = vcmp.eq.s32.totalorder %v32, %v79
    %vm82 = vmor %vm72, %vm80
    %vm83 = vmor %vm73, %vm81
    %84 = vset.pattern.permute.xlu0 5
    %85 = vperm.xlu0 %84, %v34
    %v86 = vpop.permute.xlu0 %85
    %87 = vset.pattern.permute.xlu0 5
    %88 = vperm.xlu0 %87, %v35
    %v89 = vpop.permute.xlu0 %88
    %vm90 = vcmp.eq.s32.totalorder %v32, %v86
    %vm91 = vcmp.eq.s32.totalorder %v32, %v89
    %vm92 = vmor %vm82, %vm90
    %vm93 = vmor %vm83, %vm91
    %94 = vset.pattern.permute.xlu0 6
    %95 = vperm.xlu0 %94, %v34
    %v96 = vpop.permute.xlu0 %95
    %97 = vset.pattern.permute.xlu0 6
    %98 = vperm.xlu0 %97, %v35
    %v99 = vpop.permute.xlu0 %98
    %vm100 = vcmp.eq.s32.totalorder %v32, %v96
    %vm101 = vcmp.eq.s32.totalorder %v32, %v99
    %vm102 = vmor %vm92, %vm100
    %vm103 = vmor %vm93, %vm101
    %104 = vset.pattern.permute.xlu0 7
    %105 = vperm.xlu0 %104, %v34
    %v106 = vpop.permute.xlu0 %105
    %107 = vset.pattern.permute.xlu0 7
    %108 = vperm.xlu0 %107, %v35
    %v109 = vpop.permute.xlu0 %108
    %vm110 = vcmp.eq.s32.totalorder %v32, %v106
    %vm111 = vcmp.eq.s32.totalorder %v32, %v109
    %vm112 = vmor %vm102, %vm110
    %vm113 = vmor %vm103, %vm111
    %v114 = vsel %vm112, 1, 0
    %v115 = vsel %vm113, 1, 0
    %v116 = vcvt.s32.f32 %v114
    %v117 = vcvt.s32.f32 %v115
    %v118 = vld [vmem:[#allocation2] sm:$0xff]
    %v119 = vld [vmem:[#allocation2 + $0x8] sm:$0xff]
    %v120 = vld [vmem:[#allocation2 + $0x10] sm:$0xff]
    %v121 = vld [vmem:[#allocation2 + $0x18] sm:$0xff]
    %v122 = vld [vmem:[#allocation2 + $0x20] sm:$0xff]
    %v123 = vld [vmem:[#allocation2 + $0x28] sm:$0xff]
    %v124 = vld [vmem:[#allocation2 + $0x30] sm:$0xff]
    %v125 = vld [vmem:[#allocation2 + $0x38] sm:$0xff]
    %v126 = vld [vmem:[#allocation2 + $0x40] sm:$0xff]
    %v127 = vld [vmem:[#allocation2 + $0x48] sm:$0xff]
    %v128 = vld [vmem:[#allocation2 + $0x50] sm:$0xff]
    %v129 = vld [vmem:[#allocation2 + $0x58] sm:$0xff]
    %v130 = vld [vmem:[#allocation2 + $0x60] sm:$0xff]
    %v131 = vld [vmem:[#allocation2 + $0x68] sm:$0xff]
    %v132 = vld [vmem:[#allocation2 + $0x70] sm:$0xff]
    %v133 = vld [vmem:[#allocation2 + $0x78] sm:$0xff]
    %v134 = vld [vmem:[%s2] sm:$0x1]
    %v136 = vlaneseq
    %v137 = vshrl.u32 %v136, 7
    %v138 = vsub.s32 0, %v137
    %v139 = vrot.slane %v134, %v138
    %141 = vmatprep.subr.mxu0 0.0
    %142 = vmatpush1.msra.mxu0 %v118
    %143 = vmatprep.subr.mxu0 0.0
    %144 = vmatpush1.msra.mxu0 %v119
    %145 = vmatprep.subr.mxu0 0.0
    %146 = vmatpush1.msra.mxu0 %v120
    %147 = vmatprep.subr.mxu0 0.0
    %148 = vmatpush1.msra.mxu0 %v121
    %149 = vmatprep.subr.mxu0 0.0
    %150 = vmatpush1.msra.mxu0 %v122
    %151 = vmatprep.subr.mxu0 0.0
    %152 = vmatpush1.msra.mxu0 %v123
    %153 = vmatprep.subr.mxu0 0.0
    %154 = vmatpush1.msra.mxu0 %v124
    %155 = vmatprep.subr.mxu0 0.0
    %156 = vmatpush1.msra.mxu0 %v125
    %157 = vmatprep.subr.mxu0 0.0
    %158 = vmatpush1.msra.mxu0 %v126
    %159 = vmatprep.subr.mxu0 0.0
    %160 = vmatpush1.msra.mxu0 %v127
    %161 = vmatprep.subr.mxu0 0.0
    %162 = vmatpush1.msra.mxu0 %v128
    %163 = vmatprep.subr.mxu0 0.0
    %164 = vmatpush1.msra.mxu0 %v129
    %165 = vmatprep.subr.mxu0 0.0
    %166 = vmatpush1.msra.mxu0 %v130
    %167 = vmatprep.subr.mxu0 0.0
    %168 = vmatpush1.msra.mxu0 %v131
    %169 = vmatprep.subr.mxu0 0.0
    %170 = vmatpush1.msra.mxu0 %v132
    %171 = vmatprep.subr.mxu0 0.0
    %172 = vmatpush1.msra.mxu0 %v133
    %173 = vmatprep.subr.mxu0 0.0
    %174 = vmatpush1.msra.mxu0 0.0
    %175 = vmatprep.subr.mxu0 0.0
    %176 = vmatpush1.msra.mxu0 0.0
    %177 = vmatprep.subr.mxu0 0.0
    %178 = vmatpush1.msra.mxu0 0.0
    %179 = vmatprep.subr.mxu0 0.0
    %180 = vmatpush1.msra.mxu0 0.0
    %181 = vmatprep.subr.mxu0 0.0
    %182 = vmatpush1.msra.mxu0 0.0
    %183 = vmatprep.subr.mxu0 0.0
    %184 = vmatpush1.msra.mxu0 0.0
    %185 = vmatprep.subr.mxu0 0.0
    %186 = vmatpush1.msra.mxu0 0.0
    %187 = vmatprep.subr.mxu0 0.0
    %188 = vmatpush1.msra.mxu0 0.0
    %189 = vmatprep.subr.mxu0 0.0
    %190 = vmatpush1.msra.mxu0 0.0
    %191 = vmatprep.subr.mxu0 0.0
    %192 = vmatpush1.msra.mxu0 0.0
    %193 = vmatprep.subr.mxu0 0.0
    %194 = vmatpush1.msra.mxu0 0.0
    %195 = vmatprep.subr.mxu0 0.0
    %196 = vmatpush1.msra.mxu0 0.0
    %197 = vmatprep.subr.mxu0 0.0
    %198 = vmatpush1.msra.mxu0 0.0
    %199 = vmatprep.subr.mxu0 0.0
    %200 = vmatpush1.msra.mxu0 0.0
    %201 = vmatprep.subr.mxu0 0.0
    %202 = vmatpush1.msra.mxu0 0.0
    %203 = vmatprep.subr.mxu0 0.0
    %204 = vmatpush1.msra.mxu0 0.0
    %205 = vmatprep.mubr.f32.mxu0 0.0
    %206 = vmatmul.mubr.f32.gmra.mrb[0].mxu0 %v116
    %v207 = vpop.f32.mrb[0].mxu0
    %v208 = vadd.f32 %v139, %v207
    %v209 = vpop.f32.mrb[0].mxu0
    %210 = vmatprep.mubr.f32.mxu0 0.0
    %211 = vmatmul.mubr.f32.gmra.mrb[0].mxu0 %v117
    %v212 = vpop.f32.mrb[0].mxu0
    %v213 = vadd.f32 %v139, %v212
    %v214 = vpop.f32.mrb[0].mxu0
    %215 = vdwg.mxu0
    %216 = vst [vmem:[#allocation5] sm:$0xff] %v208
    %217 = vst [vmem:[#allocation5 + $0x8] sm:$0xff] %v213
    // Predicated region
    $region18: #{tpu_custom_call.1} parent=1 // pred_check
      _
    $region19: #{tpu_custom_call.1} parent=1 // pred_check_branch
      %219 = sbr.rel (0) target = $region21
    $region20: #{tpu_custom_call.1} parent=1 // pred_region
      %s221 = ssub.s32 256, 256
      %222 = vsyncadd [#allocation4], %s221
      %s223 = sshll.u32 [#allocation5], 4
      %s224 = int_to_ptr.vmem [resolvable:$true] %s223
      %229 = dma.vmem_to_hbm [thread:$0]  %s224, 256, %s3, [#allocation4], 128, 128, 8
    $region21: #{tpu_custom_call.1} parent=1 // pred_fallthru
      _
    // Predicated region
    $region22: #{tpu_custom_call.1} parent=1 // pred_check
      _
    $region23: #{tpu_custom_call.1} parent=1 // pred_check_branch
      %231 = sbr.rel (0) target = $region25
    $region24: #{tpu_custom_call.1} parent=1 // pred_region
      %232 = dma.done [#allocation4], 256
    $region25: #{tpu_custom_call.1} parent=1 // pred_fallthru
      _
    %233 = vsyncpa [#allocation3], 1
    %234 = vsyncpa [#allocation4], 1

</llo_original>
